<compile_context>
chip_gen: v6e
topology: v6e:2x2x1
jax: 0.10.0
libtpu: 0.0.40
codegen_flags: <defaults>
</compile_context>

<pallas_src>
import math
from functools import partial

import jax
import jax.numpy as jnp
from jax.experimental import pallas as pl
from jax.experimental.pallas import tpu as pltpu

EPS = 1e-6
_COMPUTE = jnp.bfloat16       # MXU input dtype (f32 accumulation everywhere)
_VMEM_LIMIT = 32 * 1024 * 1024


# ---------------------------------------------------------------------------
# shared in-kernel helpers
# ---------------------------------------------------------------------------
def _layernorm(x, gamma, beta, eps=EPS):
    """Matches the reference LayerNorm: unbiased std, gamma*(x-mean)/(std+eps)+beta."""
    x = x.astype(jnp.float32)
    d = x.shape[-1]
    mean = jnp.mean(x, axis=-1, keepdims=True)
    c = x - mean
    var = jnp.sum(c * c, axis=-1, keepdims=True) * (1.0 / (d - 1))
    inv = pl.reciprocal(jnp.sqrt(var) + eps, approx=False)
    return gamma * (c * inv) + beta


# ---------------------------------------------------------------------------
# FeedForward kernel (embedding MLPs):  out = [x +] Lin2(relu(Lin1(LayerNorm(x))))
# One kernel shared by all embed MLPs; gridded over (which-mlp, row-tile).
# ---------------------------------------------------------------------------
def ff_kernel(x_ref, g_ref, b_ref, w1_ref, b1_ref, w2_ref, b2_ref, o_ref, *, residual):
    x = x_ref[...].astype(jnp.float32)
    h = _layernorm(x, g_ref[...], b_ref[...])
    h = jnp.dot(h.astype(_COMPUTE), w1_ref[...],
                preferred_element_type=jnp.float32) + b1_ref[...]
    h = jnp.maximum(h, 0.0)  # relu
    y = jnp.dot(h.astype(_COMPUTE), w2_ref[...],
                preferred_element_type=jnp.float32) + b2_ref[...]
    if residual:
        y = y + x
    o_ref[...] = y.astype(o_ref.dtype)


def _row_tile(n_rows, cap=2048):
    """Largest row tile <= cap dividing n_rows (multiple of 8); falls back to a
    single full block (block == full array dim is always legal)."""
    if n_rows <= cap:
        return n_rows
    t = cap - (cap % 8)
    while t >= 8:
        if n_rows % t == 0:
            return t
        t -= 8
    return n_rows


def fused_feed_forward(xs, ps, *, residual, out_dtype=jnp.float32):
    """Run n independent FeedForward MLPs (same shapes) in ONE pallas_call.

    xs: list of (B, S, d_in) inputs;  ps: list of matching parameter dicts.
    Returns a list of (B, S, d_out) outputs in `out_dtype`.
    """
    n = len(xs)
    B, S, d_in = xs[0].shape
    R = B * S
    d_ff = ps[0]["w1"].shape[1]
    d_out = ps[0]["w2"].shape[1]
    TR = _row_tile(R)

    x = jnp.stack([xi.reshape(R, d_in) for xi in xs])          # (n, R, d_in)
    ln_g = jnp.stack([p["ln_g"] for p in ps])                  # (n, 1, d_in)
    ln_b = jnp.stack([p["ln_b"] for p in ps])
    w1 = jnp.stack([p["w1"] for p in ps])                      # (n, d_in, d_ff)
    b1 = jnp.stack([p["b1"] for p in ps])                      # (n, 1, d_ff)
    w2 = jnp.stack([p["w2"] for p in ps])                      # (n, d_ff, d_out)
    b2 = jnp.stack([p["b2"] for p in ps])                      # (n, 1, d_out)

    out = pl.pallas_call(
        partial(ff_kernel, residual=residual),
        out_shape=jax.ShapeDtypeStruct((n, R, d_out), out_dtype),
        grid=(n, R // TR),
        in_specs=[
            pl.BlockSpec((None, TR, d_in), lambda e, i: (e, i, 0)),
            pl.BlockSpec((None, 1, d_in), lambda e, i: (e, 0, 0)),
            pl.BlockSpec((None, 1, d_in), lambda e, i: (e, 0, 0)),
            pl.BlockSpec((None, d_in, d_ff), lambda e, i: (e, 0, 0)),
            pl.BlockSpec((None, 1, d_ff), lambda e, i: (e, 0, 0)),
            pl.BlockSpec((None, d_ff, d_out), lambda e, i: (e, 0, 0)),
            pl.BlockSpec((None, 1, d_out), lambda e, i: (e, 0, 0)),
        ],
        out_specs=pl.BlockSpec((None, TR, d_out), lambda e, i: (e, i, 0)),
        compiler_params=pltpu.CompilerParams(
            dimension_semantics=("parallel", "parallel"),
            vmem_limit_bytes=_VMEM_LIMIT),
    )(x, ln_g, ln_b, w1, b1, w2, b2)
    return [out[e].reshape(B, S, d_out) for e in range(n)]


# ---------------------------------------------------------------------------
# Fused transformer layer kernel: MultiHeadedAttention + FeedForward [+ final LayerNorm]
# One batch element per grid step.
# ---------------------------------------------------------------------------
def layer_kernel(k_ref, q_ref, v_ref,
                 ag_ref, ab_ref,
                 w0_ref, b0_ref, w1_ref, b1_ref, w2_ref, b2_ref,
                 w3_ref, b3_ref,
                 fg_ref, fb_ref, fw1_ref, fb1_ref, fw2_ref, fb2_ref,
                 *rest, n_heads, scale, residual, apply_final_ln):
    if apply_final_ln:
        lg_ref, lb_ref, o_ref = rest
    else:
        (o_ref,) = rest

    S, D = k_ref.shape
    dk = D // n_heads

    ag = ag_ref[...]
    ab = ab_ref[...]
    kn = _layernorm(k_ref[...], ag, ab)
    qn = _layernorm(q_ref[...], ag, ab)
    vn = _layernorm(v_ref[...], ag, ab)

    # Full-width projections (lane-dense N=D on the MXU).
    # Reference mapping: query <- lin0(norm(k)), key <- lin1(norm(q)), value <- lin2(norm(v)).
    query = jnp.dot(kn.astype(_COMPUTE), w0_ref[...],
                    preferred_element_type=jnp.float32) + b0_ref[...]
    key = jnp.dot(qn.astype(_COMPUTE), w1_ref[...],
                  preferred_element_type=jnp.float32) + b1_ref[...]
    value = jnp.dot(vn.astype(_COMPUTE), w2_ref[...],
                    preferred_element_type=jnp.float32) + b2_ref[...]

    # Fold temperature/sqrt(dk) into the f32 query (cheaper than scaling (h,S,S) scores).
    query = query * scale

    w3 = w3_ref[...]                        # (D, D) bf16 output projection
    attn_out = b3_ref[...]                  # (1, D); broadcasts on first accumulation

    # Per-head attention. Heads are static lane slices of the projected tensors; the
    # head-concat + output projection is fused by accumulating ctx_h @ W3[rows of head h].
    for hh in range(n_heads):
        lo, hi = hh * dk, (hh + 1) * dk
        qh = query[:, lo:hi].astype(_COMPUTE)                      # (S, dk)
        kh = key[:, lo:hi].astype(_COMPUTE)                        # (S, dk)
        vh = value[:, lo:hi].astype(_COMPUTE)                      # (S, dk)
        s = jnp.einsum('qd,td->qt', qh, kh,
                       preferred_element_type=jnp.float32)         # (S, S)
        s = s - jnp.max(s, axis=-1, keepdims=True)
        e = jnp.exp(s)
        p = e * pl.reciprocal(jnp.sum(e, axis=-1, keepdims=True), approx=True)
        ctx = jnp.dot(p.astype(_COMPUTE), vh,
                      preferred_element_type=jnp.float32)          # (S, dk)
        attn_out = attn_out + jnp.dot(ctx.astype(_COMPUTE), w3[lo:hi, :],
                                      preferred_element_type=jnp.float32)   # (S, D)

    if residual:
        attn_out = attn_out + vn            # reference adds the *normalized* v

    # FeedForward block: x + Lin2(relu(Lin1(LayerNorm(x))))
    hff = _layernorm(attn_out, fg_ref[...], fb_ref[...])
    h1 = jnp.dot(hff.astype(_COMPUTE), fw1_ref[...],
                 preferred_element_type=jnp.float32) + fb1_ref[...]
    h1 = jnp.maximum(h1, 0.0)
    y = jnp.dot(h1.astype(_COMPUTE), fw2_ref[...],
                preferred_element_type=jnp.float32) + fb2_ref[...]
    if residual:
        y = y + attn_out

    if apply_final_ln:
        y = _layernorm(y, lg_ref[...], lb_ref[...])
    o_ref[...] = y.astype(o_ref.dtype)


def attention_ff_layer(k, q, v, attn_p, ff_p, final_ln, *,
                       n_heads, temperature, residual, apply_final_ln,
                       out_dtype=jnp.float32):
    B, S, D = k.shape
    dk = D // n_heads
    # reference: scores = QK^T / sqrt(d_k), then (scores * temperature).softmax(-1)
    scale = temperature / math.sqrt(dk)
    d_ff = ff_p["w1"].shape[1]

    kqv_spec = pl.BlockSpec((None, S, D), lambda b: (b, 0, 0))
    vecD = pl.BlockSpec((1, D), lambda b: (0, 0))
    mat_DD = pl.BlockSpec((D, D), lambda b: (0, 0))
    w_ff1 = pl.BlockSpec((D, d_ff), lambda b: (0, 0))
    b_ff1 = pl.BlockSpec((1, d_ff), lambda b: (0, 0))
    w_ff2 = pl.BlockSpec((d_ff, D), lambda b: (0, 0))

    in_specs = [kqv_spec, kqv_spec, kqv_spec,
                vecD, vecD,
                mat_DD, vecD, mat_DD, vecD, mat_DD, vecD,
                mat_DD, vecD,
                vecD, vecD, w_ff1, b_ff1, w_ff2, vecD]
    args = [k, q, v,
            attn_p["ln_g"], attn_p["ln_b"],
            attn_p["w0"], attn_p["b0"], attn_p["w1"], attn_p["b1"],
            attn_p["w2"], attn_p["b2"], attn_p["w3"], attn_p["b3"],
            ff_p["ln_g"], ff_p["ln_b"],
            ff_p["w1"], ff_p["b1"], ff_p["w2"], ff_p["b2"]]
    if apply_final_ln:
        ln_spec = pl.BlockSpec((1, d_ff), lambda b: (0, 0))
        in_specs += [ln_spec, ln_spec]
        args += [final_ln[0], final_ln[1]]

    out = pl.pallas_call(
        partial(layer_kernel, n_heads=n_heads, scale=scale,
                residual=residual, apply_final_ln=apply_final_ln),
        out_shape=jax.ShapeDtypeStruct((B, S, D), out_dtype),
        grid=(B,),
        in_specs=in_specs,
        out_specs=pl.BlockSpec((None, S, D), lambda b: (b, 0, 0)),
        compiler_params=pltpu.CompilerParams(
            dimension_semantics=("parallel",),
            vmem_limit_bytes=_VMEM_LIMIT),
    )(*args)
    return out


# ---------------------------------------------------------------------------
# Parameter construction (deterministic, xavier-uniform like the reference init)
# ---------------------------------------------------------------------------
def _xavier(key, fan_in, fan_out):
    lim = math.sqrt(6.0 / (fan_in + fan_out))
    return jax.random.uniform(key, (fan_in, fan_out), jnp.float32, -lim, lim)


def make_ff_params(key, d_in, d_ff, d_out):
    k1, k2 = jax.random.split(key)
    return dict(
        ln_g=jnp.ones((1, d_in), jnp.float32),
        ln_b=jnp.zeros((1, d_in), jnp.float32),
        w1=_xavier(k1, d_in, d_ff).astype(_COMPUTE),
        b1=jnp.zeros((1, d_ff), jnp.float32),
        w2=_xavier(k2, d_ff, d_out).astype(_COMPUTE),
        b2=jnp.zeros((1, d_out), jnp.float32),
    )


def make_mha_params(key, d_model, n_heads):
    assert d_model % n_heads == 0
    ks = jax.random.split(key, 4)
    p = dict(ln_g=jnp.ones((1, d_model), jnp.float32),
             ln_b=jnp.zeros((1, d_model), jnp.float32))
    for i in range(3):
        p[f"w{i}"] = _xavier(ks[i], d_model, d_model).astype(_COMPUTE)
        p[f"b{i}"] = jnp.zeros((1, d_model), jnp.float32)
    p["w3"] = _xavier(ks[3], d_model, d_model).astype(_COMPUTE)
    p["b3"] = jnp.zeros((1, d_model), jnp.float32)
    return p


def make_embed_transformer_params(key, *, d_kq, d_v, d_model, d_ff, d_ff_embed,
                                  n_heads, N):
    # concat=False: the final norm is LayerNorm(d_ff) applied to a d_model vector.
    assert d_ff == d_model, "final LayerNorm(d_ff) requires d_ff == d_model when concat=False"
    keys = jax.random.split(key, 3 + 2 * N)
    return dict(
        k_embed=make_ff_params(keys[0], d_kq, d_ff_embed, d_model),
        q_embed=make_ff_params(keys[1], d_kq, d_ff_embed, d_model),
        v_embed=make_ff_params(keys[2], d_v, d_ff_embed, d_model),
        attn=[make_mha_params(keys[3 + 2 * i], d_model, n_heads) for i in range(N)],
        ff=[make_ff_params(keys[4 + 2 * i], d_model, d_ff, d_model) for i in range(N)],
        final_ln_g=jnp.ones((1, d_ff), jnp.float32),
        final_ln_b=jnp.zeros((1, d_ff), jnp.float32),
    )


# ---------------------------------------------------------------------------
# EmbedTransformer forward
# ---------------------------------------------------------------------------
def embed_transformer_forward(k, q, v, kernels, params, *, N, n_heads, temperature=1.0):
    del kernels  # unused in the reference forward as well

    # embedding MLPs (residual_embed=False by default); one fused pallas_call when
    # d_kq == d_v, otherwise k/q merged and v separate. Outputs bf16 (next layer
    # casts to bf16 for every matmul anyway).
    if k.shape[-1] == v.shape[-1]:
        k, q, v = fused_feed_forward(
            [k, q, v], [params["k_embed"], params["q_embed"], params["v_embed"]],
            residual=False, out_dtype=_COMPUTE)
    else:
        k, q = fused_feed_forward(
            [k, q], [params["k_embed"], params["q_embed"]],
            residual=False, out_dtype=_COMPUTE)
        (v,) = fused_feed_forward(
            [v], [params["v_embed"]], residual=False, out_dtype=_COMPUTE)

    final_ln = (params["final_ln_g"], params["final_ln_b"])
    x = None
    for i in range(N):
        last = (i == N - 1)
        inputs = (k, q, v) if i == 0 else (x, x, x)
        x = attention_ff_layer(
            *inputs, params["attn"][i], params["ff"][i],
            final_ln if last else None,
            n_heads=n_heads, temperature=temperature, residual=True,
            apply_final_ln=last,
            out_dtype=jnp.float32 if last else _COMPUTE)
    return x


# ---------------------------------------------------------------------------
if __name__ == "__main__":
    # Small configuration consistent with the module's constructor; feature dims are
    # lane-dense (multiples of 128) so stores are unmasked, and B=4 gives each v7x
    # TensorCore two grid iterations of the per-batch layer kernel.
    B, S = 4, 8
    d_kq, d_v = 4, 4
    d_model = 128
    d_ff = 128          # == d_model so the final LayerNorm(d_ff) is well-formed
    d_ff_embed = 128
    n_heads = 4
    N = 2

    root = jax.random.PRNGKey(0)
    kp, kin = jax.random.split(root)
    params = make_embed_transformer_params(
        kp, d_kq=d_kq, d_v=d_v, d_model=d_model, d_ff=d_ff,
        d_ff_embed=d_ff_embed, n_heads=n_heads, N=N)

    kk, kq, kv = jax.random.split(kin, 3)
    k_in = jax.random.normal(kk, (B, S, d_kq), jnp.float32)
    q_in = jax.random.normal(kq, (B, S, d_kq), jnp.float32)
    v_in = jax.random.normal(kv, (B, S, d_v), jnp.float32)

    out = embed_transformer_forward(k_in, q_in, v_in, None, params,
                                    N=N, n_heads=n_heads)
    jax.block_until_ready(out)
    assert out.shape == (B, S, d_model)
    assert bool(jnp.all(jnp.isfinite(out)))
    print("KERNEL_OK")
</pallas_src>

<mosaic_0001>
module attributes {stable_mosaic.version = 11 : i64} {
  func.func @ff_kernel(%arg0: i32, %arg1: i32, %arg2: memref<1x32x4xf32, #tpu.memory_space<vmem>>, %arg3: memref<1x1x4xf32, #tpu.memory_space<vmem>>, %arg4: memref<1x1x4xf32, #tpu.memory_space<vmem>>, %arg5: memref<1x4x128xbf16, #tpu.memory_space<vmem>>, %arg6: memref<1x1x128xf32, #tpu.memory_space<vmem>>, %arg7: memref<1x128x128xbf16, #tpu.memory_space<vmem>>, %arg8: memref<1x1x128xf32, #tpu.memory_space<vmem>>, %arg9: memref<1x32x128xbf16, #tpu.memory_space<vmem>>) attributes {dimension_semantics = [#tpu.dimension_semantics<parallel>, #tpu.dimension_semantics<parallel>], iteration_bounds = array<i64: 3, 1>, scalar_prefetch = 0 : i64, scratch_operands = 0 : i64, tpu.core_type = #tpu.core_type<tc>, window_params = [{transform_indices = @transform_0, window_bounds = array<i64: 1, 32, 4>}, {transform_indices = @transform_1, window_bounds = array<i64: 1, 1, 4>}, {transform_indices = @transform_2, window_bounds = array<i64: 1, 1, 4>}, {transform_indices = @transform_3, window_bounds = array<i64: 1, 4, 128>}, {transform_indices = @transform_4, window_bounds = array<i64: 1, 1, 128>}, {transform_indices = @transform_5, window_bounds = array<i64: 1, 128, 128>}, {transform_indices = @transform_6, window_bounds = array<i64: 1, 1, 128>}, {transform_indices = @transform_7, window_bounds = array<i64: 1, 32, 128>}]} {
    %c0 = arith.constant 0 : index
    %c0_0 = arith.constant 0 : index
    %c0_1 = arith.constant 0 : index
    %0 = vector.load %arg2[%c0, %c0_0, %c0_1] : memref<1x32x4xf32, #tpu.memory_space<vmem>>, vector<1x32x4xf32>
    %1 = vector.shape_cast %0 : vector<1x32x4xf32> to vector<32x4xf32>
    %c0_2 = arith.constant 0 : index
    %c0_3 = arith.constant 0 : index
    %c0_4 = arith.constant 0 : index
    %2 = vector.load %arg3[%c0_2, %c0_3, %c0_4] : memref<1x1x4xf32, #tpu.memory_space<vmem>>, vector<1x1x4xf32>
    %3 = vector.shape_cast %2 : vector<1x1x4xf32> to vector<1x4xf32>
    %c0_5 = arith.constant 0 : index
    %c0_6 = arith.constant 0 : index
    %c0_7 = arith.constant 0 : index
    %4 = vector.load %arg4[%c0_5, %c0_6, %c0_7] : memref<1x1x4xf32, #tpu.memory_space<vmem>>, vector<1x1x4xf32>
    %5 = vector.shape_cast %4 : vector<1x1x4xf32> to vector<1x4xf32>
    %cst = arith.constant dense<0.000000e+00> : vector<32xf32>
    %6 = vector.multi_reduction <add>, %1, %cst [1] : vector<32x4xf32> to vector<32xf32>
    %7 = vector.shape_cast %6 : vector<32xf32> to vector<32x1xf32>
    %cst_8 = arith.constant 4.000000e+00 : f32
    %8 = vector.broadcast %cst_8 : f32 to vector<32x1xf32>
    %9 = arith.divf %7, %8 : vector<32x1xf32>
    %10 = vector.broadcast %9 : vector<32x1xf32> to vector<32x4xf32>
    %11 = arith.subf %1, %10 : vector<32x4xf32>
    %12 = arith.mulf %11, %11 : vector<32x4xf32>
    %cst_9 = arith.constant dense<0.000000e+00> : vector<32xf32>
    %13 = vector.multi_reduction <add>, %12, %cst_9 [1] : vector<32x4xf32> to vector<32xf32>
    %14 = vector.shape_cast %13 : vector<32xf32> to vector<32x1xf32>
    %cst_10 = arith.constant 0.333333343 : f32
    %15 = vector.broadcast %cst_10 : f32 to vector<32x1xf32>
    %16 = arith.mulf %14, %15 : vector<32x1xf32>
    %17 = math.sqrt %16 : vector<32x1xf32>
    %cst_11 = arith.constant 9.99999997E-7 : f32
    %18 = vector.broadcast %cst_11 : f32 to vector<32x1xf32>
    %19 = arith.addf %17, %18 : vector<32x1xf32>
    %20 = tpu.reciprocal %19 : vector<32x1xf32> -> vector<32x1xf32>
    %21 = vector.broadcast %20 : vector<32x1xf32> to vector<32x4xf32>
    %22 = arith.mulf %11, %21 : vector<32x4xf32>
    %23 = vector.broadcast %3 : vector<1x4xf32> to vector<32x4xf32>
    %24 = arith.mulf %23, %22 : vector<32x4xf32>
    %25 = vector.broadcast %5 : vector<1x4xf32> to vector<32x4xf32>
    %26 = arith.addf %24, %25 : vector<32x4xf32>
    %27 = arith.truncf %26 : vector<32x4xf32> to vector<32x4xbf16>
    %c0_12 = arith.constant 0 : index
    %c0_13 = arith.constant 0 : index
    %c0_14 = arith.constant 0 : index
    %28 = vector.load %arg5[%c0_12, %c0_13, %c0_14] : memref<1x4x128xbf16, #tpu.memory_space<vmem>>, vector<1x4x128xbf16>
    %29 = vector.shape_cast %28 : vector<1x4x128xbf16> to vector<4x128xbf16>
    %cst_15 = arith.constant dense<0.000000e+00> : vector<32x128xf32>
    %30 = tpu.matmul %27, %29, %cst_15 {dimension_numbers = #tpu.dot_dimension_numbers<[1], [0], [0], [1], [0, 0, 1, 1], [], []>} : vector<32x4xbf16>, vector<4x128xbf16>, vector<32x128xf32> -> vector<32x128xf32>
    %c0_16 = arith.constant 0 : index
    %c0_17 = arith.constant 0 : index
    %c0_18 = arith.constant 0 : index
    %31 = vector.load %arg6[%c0_16, %c0_17, %c0_18] : memref<1x1x128xf32, #tpu.memory_space<vmem>>, vector<1x1x128xf32>
    %32 = vector.shape_cast %31 : vector<1x1x128xf32> to vector<1x128xf32>
    %33 = vector.broadcast %32 : vector<1x128xf32> to vector<32x128xf32>
    %34 = arith.addf %30, %33 : vector<32x128xf32>
    %cst_19 = arith.constant 0.000000e+00 : f32
    %35 = vector.broadcast %cst_19 : f32 to vector<32x128xf32>
    %36 = arith.maximumf %34, %35 : vector<32x128xf32>
    %37 = arith.truncf %36 : vector<32x128xf32> to vector<32x128xbf16>
    %c0_20 = arith.constant 0 : index
    %c0_21 = arith.constant 0 : index
    %c0_22 = arith.constant 0 : index
    %38 = vector.load %arg7[%c0_20, %c0_21, %c0_22] : memref<1x128x128xbf16, #tpu.memory_space<vmem>>, vector<1x128x128xbf16>
    %39 = vector.shape_cast %38 : vector<1x128x128xbf16> to vector<128x128xbf16>
    %cst_23 = arith.constant dense<0.000000e+00> : vector<32x128xf32>
    %40 = tpu.matmul %37, %39, %cst_23 {dimension_numbers = #tpu.dot_dimension_numbers<[1], [0], [0], [1], [0, 0, 1, 1], [], []>} : vector<32x128xbf16>, vector<128x128xbf16>, vector<32x128xf32> -> vector<32x128xf32>
    %c0_24 = arith.constant 0 : index
    %c0_25 = arith.constant 0 : index
    %c0_26 = arith.constant 0 : index
    %41 = vector.load %arg8[%c0_24, %c0_25, %c0_26] : memref<1x1x128xf32, #tpu.memory_space<vmem>>, vector<1x1x128xf32>
    %42 = vector.shape_cast %41 : vector<1x1x128xf32> to vector<1x128xf32>
    %43 = vector.broadcast %42 : vector<1x128xf32> to vector<32x128xf32>
    %44 = arith.addf %40, %43 : vector<32x128xf32>
    %45 = arith.truncf %44 : vector<32x128xf32> to vector<32x128xbf16>
    %c0_27 = arith.constant 0 : index
    %c0_28 = arith.constant 0 : index
    %c0_29 = arith.constant 0 : index
    %46 = vector.load %arg9[%c0_27, %c0_28, %c0_29] : memref<1x32x128xbf16, #tpu.memory_space<vmem>>, vector<1x32x128xbf16>
    %47 = vector.shape_cast %46 : vector<1x32x128xbf16> to vector<32x128xbf16>
    %48 = vector.shape_cast %45 : vector<32x128xbf16> to vector<1x32x128xbf16>
    tpu.vector_store %arg9[%c0_27, %c0_28, %c0_29], %48 {strides = array<i32>} : memref<1x32x128xbf16, #tpu.memory_space<vmem>>, vector<1x32x128xbf16>,
    return
  }
  func.func @transform_0(%arg0: i32, %arg1: i32) -> (i32, i32, i32) {
    %c0_i32 = arith.constant 0 : i32
    %c0_i32_0 = arith.constant 0 : i32
    return %arg0, %arg1, %c0_i32 : i32, i32, i32
  }
  func.func @transform_1(%arg0: i32, %arg1: i32) -> (i32, i32, i32) {
    %c0_i32 = arith.constant 0 : i32
    %c0_i32_0 = arith.constant 0 : i32
    %c0_i32_1 = arith.constant 0 : i32
    return %arg0, %c0_i32, %c0_i32_0 : i32, i32, i32
  }
  func.func @transform_2(%arg0: i32, %arg1: i32) -> (i32, i32, i32) {
    %c0_i32 = arith.constant 0 : i32
    %c0_i32_0 = arith.constant 0 : i32
    %c0_i32_1 = arith.constant 0 : i32
    return %arg0, %c0_i32, %c0_i32_0 : i32, i32, i32
  }
  func.func @transform_3(%arg0: i32, %arg1: i32) -> (i32, i32, i32) {
    %c0_i32 = arith.constant 0 : i32
    %c0_i32_0 = arith.constant 0 : i32
    %c0_i32_1 = arith.constant 0 : i32
    return %arg0, %c0_i32, %c0_i32_0 : i32, i32, i32
  }
  func.func @transform_4(%arg0: i32, %arg1: i32) -> (i32, i32, i32) {
    %c0_i32 = arith.constant 0 : i32
    %c0_i32_0 = arith.constant 0 : i32
    %c0_i32_1 = arith.constant 0 : i32
    return %arg0, %c0_i32, %c0_i32_0 : i32, i32, i32
  }
  func.func @transform_5(%arg0: i32, %arg1: i32) -> (i32, i32, i32) {
    %c0_i32 = arith.constant 0 : i32
    %c0_i32_0 = arith.constant 0 : i32
    %c0_i32_1 = arith.constant 0 : i32
    return %arg0, %c0_i32, %c0_i32_0 : i32, i32, i32
  }
  func.func @transform_6(%arg0: i32, %arg1: i32) -> (i32, i32, i32) {
    %c0_i32 = arith.constant 0 : i32
    %c0_i32_0 = arith.constant 0 : i32
    %c0_i32_1 = arith.constant 0 : i32
    return %arg0, %c0_i32, %c0_i32_0 : i32, i32, i32
  }
  func.func @transform_7(%arg0: i32, %arg1: i32) -> (i32, i32, i32) {
    %c0_i32 = arith.constant 0 : i32
    %c0_i32_0 = arith.constant 0 : i32
    return %arg0, %arg1, %c0_i32 : i32, i32, i32
  }
}

</mosaic_0001>

<llo_original>
// kernel: tpu_custom_call.1
$region0: #{tpu_custom_call.1}
  #allocation0 [shape = 'u32[]', space=smem, size = 0x4, offset = 0x4, fixed_abs, tag = 'smem constant byte address 0x4 - core index']
  #allocation1 [shape = 'u32[144,128]{1,0:T(1,128)}', space=vmem, size = 0x12000, scoped, tag = 'internal scratch']
  %s0 = inlined_call_operand.vmem [shape: f32[3,32,4], index: 0, kind: input, shape index: {}]
  %s1 = inlined_call_operand.vmem [shape: f32[3,1,4], index: 1, kind: input, shape index: {}]
  %s2 = inlined_call_operand.vmem [shape: f32[3,1,4], index: 2, kind: input, shape index: {}]
  %s3 = inlined_call_operand.vmem [shape: bf16[3,4,128], index: 3, kind: input, shape index: {}]
  %s4 = inlined_call_operand.vmem [shape: f32[3,1,128], index: 4, kind: input, shape index: {}]
  %s5 = inlined_call_operand.hbm [shape: bf16[3,128,128], index: 5, kind: input, shape index: {}]
  %s6 = inlined_call_operand.vmem [shape: f32[3,1,128], index: 6, kind: input, shape index: {}]
  %s7 = inlined_call_operand.hbm [shape: bf16[3,32,128], index: 7, kind: output, shape index: {}]
  %s8 = sld [smem:[#allocation0]]
  $region65: #{tpu_custom_call.1} parent=0
    _
  %s10 = ssub.s32 1, %s8
  %s11 = scalar_select 0, %s10, %s8
  $region1: #{tpu_custom_call.1} parent=0
    #allocation2 [shape = 'u8[65536]{0}', space=vmem, size = 0x10000, scoped, tag = 'input window, operand 5']
    #allocation3 [shape = 's32[2]{0}', space=sflag, size = 0x8, scoped, tag = 'scoped memory for tpu_custom_call.1']
    #allocation4 [shape = 's32[2]{0}', space=sflag, size = 0x8, scoped, tag = 'scoped memory for tpu_custom_call.1']
    #allocation5 [shape = 'u8[16384]{0}', space=vmem, size = 0x4000, scoped, tag = 'output window, operand 0']
    %12 = vsyncpa [#allocation3], 0
    %s13 = scalar_lea.sflag [#allocation3], 1
    %14 = vsyncpa %s13, 0
    %15 = vsyncpa [#allocation4], 0
    %s16 = scalar_lea.sflag [#allocation4], 1
    %17 = vsyncpa %s16, 0
    loop: start=0, step=1, limit=5
    $region2: #{tpu_custom_call.1} parent=1 // loop_pre_header
      _
    $region3: #{tpu_custom_call.1} parent=1 // loop_header
      %s19 = sphi 0, %s23
      %p20 = scmp.ge.s32.totalorder %s19, 5
      %s26 = sphi 0, %s38
      %s27 = sphi 0, %s34
      %s28 = sphi 0, %s26
      %s29 = sphi 0, %s27
      %s30 = sphi 0, %s28
      %s31 = sphi 0, %s29
      %s43 = sphi 0, %s45
      %s46 = sphi 0, %s43
      %s47 = sphi 0, %s46
      %s63 = sphi 0, %s47
      %s69 = sphi 0, %s71
      %s72 = sphi 0, %s69
      %s73 = sphi 0, %s72
      %s89 = sphi 0, %s73
      %s95 = sphi 0, %s97
      %s98 = sphi 0, %s95
      %s99 = sphi 0, %s98
      %s115 = sphi 0, %s99
      %s121 = sphi 0, %s123
      %s124 = sphi 0, %s121
      %s125 = sphi 0, %s124
      %s141 = sphi 0, %s125
      %s147 = sphi 0, %s149
      %s150 = sphi 0, %s147
      %s151 = sphi 0, %s150
      %s167 = sphi 0, %s151
      %s173 = sphi 0, %s175
      %s176 = sphi 0, %s173
      %s177 = sphi 0, %s176
      %s193 = sphi 0, %s177
      %s199 = sphi 0, %s201
      %s202 = sphi 0, %s199
      %s203 = sphi 0, %s202
      %s219 = sphi 0, %s203
      %s227 = sphi 0, %s229
      %s230 = sphi 0, %s227
      %s231 = sphi 0, %s230
      %s247 = sphi 0, %s231
    $region4: #{tpu_custom_call.1} parent=1 // loop_header_branch
      %22 = sbr.rel (%p20) target = $region8
    $region5: #{tpu_custom_call.1} parent=1 // loop_body
      %s24 = ssub.s32 %s19, 1
      %s25 = ssub.s32 %s19, 2
      %s32 = sadd.s32 1, %s27
      %p33 = scmp.ge.s32.totalorder %s32, 1
      %s34 = scalar_select %p33, 0, %s32
      %s35 = sadd.s32 1, %s26
      %s36 = scalar_select %p33, %s35, %s26
      %p37 = scmp.ge.s32.totalorder %s36, 3
      %s38 = scalar_select %p37, 0, %s36
      %s39 = ssub.s32 %s26, %s38
      %s40 = ssub.s32 %s27, %s34
      %s41 = sor.u32 %s39, %s40
      %p42 = scmp.eq.s32.totalorder %s41, 0
      %s44 = sadd.s32 %s43, 1
      %s45 = scalar_select %p42, %s43, %s44
      %p48 = pneg %p42
      %p49 = scmp.eq.s32.totalorder %s19, 2
      %p50 = por %p48, %p49
      %p51 = scmp.ne.s32.totalorder %s43, %s46
      %p52 = scmp.eq.s32.totalorder %s19, 0
      %p53 = por %p51, %p52
      %p54 = scmp.ne.s32.totalorder %s43, %s46
      %p55 = scmp.eq.s32.totalorder %s24, 2
      %p56 = por %p54, %p55
      %p57 = scmp.ne.s32.totalorder %s46, %s47
      %p58 = scmp.eq.s32.totalorder %s24, 0
      %p59 = por %p57, %p58
      %p60 = scmp.ne.s32.totalorder %s46, %s47
      %p61 = scmp.eq.s32.totalorder %s25, 2
      %p62 = por %p60, %p61
      %p64 = scmp.ne.s32.totalorder %s47, %s63
      %p65 = scmp.eq.s32.totalorder %s25, 0
      %p66 = por %p64, %p65
      %s67 = ssub.s32 %s26, %s38
      %p68 = scmp.eq.s32.totalorder %s67, 0
      %s70 = sadd.s32 %s69, 1
      %s71 = scalar_select %p68, %s69, %s70
      %p74 = pneg %p68
      %p75 = scmp.eq.s32.totalorder %s19, 2
      %p76 = por %p74, %p75
      %p77 = scmp.ne.s32.totalorder %s69, %s72
      %p78 = scmp.eq.s32.totalorder %s19, 0
      %p79 = por %p77, %p78
      %p80 = scmp.ne.s32.totalorder %s69, %s72
      %p81 = scmp.eq.s32.totalorder %s24, 2
      %p82 = por %p80, %p81
      %p83 = scmp.ne.s32.totalorder %s72, %s73
      %p84 = scmp.eq.s32.totalorder %s24, 0
      %p85 = por %p83, %p84
      %p86 = scmp.ne.s32.totalorder %s72, %s73
      %p87 = scmp.eq.s32.totalorder %s25, 2
      %p88 = por %p86, %p87
      %p90 = scmp.ne.s32.totalorder %s73, %s89
      %p91 = scmp.eq.s32.totalorder %s25, 0
      %p92 = por %p90, %p91
      %s93 = ssub.s32 %s26, %s38
      %p94 = scmp.eq.s32.totalorder %s93, 0
      %s96 = sadd.s32 %s95, 1
      %s97 = scalar_select %p94, %s95, %s96
      %p100 = pneg %p94
      %p101 = scmp.eq.s32.totalorder %s19, 2
      %p102 = por %p100, %p101
      %p103 = scmp.ne.s32.totalorder %s95, %s98
      %p104 = scmp.eq.s32.totalorder %s19, 0
      %p105 = por %p103, %p104
      %p106 = scmp.ne.s32.totalorder %s95, %s98
      %p107 = scmp.eq.s32.totalorder %s24, 2
      %p108 = por %p106, %p107
      %p109 = scmp.ne.s32.totalorder %s98, %s99
      %p110 = scmp.eq.s32.totalorder %s24, 0
      %p111 = por %p109, %p110
      %p112 = scmp.ne.s32.totalorder %s98, %s99
      %p113 = scmp.eq.s32.totalorder %s25, 2
      %p114 = por %p112, %p113
      %p116 = scmp.ne.s32.totalorder %s99, %s115
      %p117 = scmp.eq.s32.totalorder %s25, 0
      %p118 = por %p116, %p117
      %s119 = ssub.s32 %s26, %s38
      %p120 = scmp.eq.s32.totalorder %s119, 0
      %s122 = sadd.s32 %s121, 1
      %s123 = scalar_select %p120, %s121, %s122
      %p126 = pneg %p120
      %p127 = scmp.eq.s32.totalorder %s19, 2
      %p128 = por %p126, %p127
      %p129 = scmp.ne.s32.totalorder %s121, %s124
      %p130 = scmp.eq.s32.totalorder %s19, 0
      %p131 = por %p129, %p130
      %p132 = scmp.ne.s32.totalorder %s121, %s124
      %p133 = scmp.eq.s32.totalorder %s24, 2
      %p134 = por %p132, %p133
      %p135 = scmp.ne.s32.totalorder %s124, %s125
      %p136 = scmp.eq.s32.totalorder %s24, 0
      %p137 = por %p135, %p136
      %p138 = scmp.ne.s32.totalorder %s124, %s125
      %p139 = scmp.eq.s32.totalorder %s25, 2
      %p140 = por %p138, %p139
      %p142 = scmp.ne.s32.totalorder %s125, %s141
      %p143 = scmp.eq.s32.totalorder %s25, 0
      %p144 = por %p142, %p143
      %s145 = ssub.s32 %s26, %s38
      %p146 = scmp.eq.s32.totalorder %s145, 0
      %s148 = sadd.s32 %s147, 1
      %s149 = scalar_select %p146, %s147, %s148
      %p152 = pneg %p146
      %p153 = scmp.eq.s32.totalorder %s19, 2
      %p154 = por %p152, %p153
      %p155 = scmp.ne.s32.totalorder %s147, %s150
      %p156 = scmp.eq.s32.totalorder %s19, 0
      %p157 = por %p155, %p156
      %p158 = scmp.ne.s32.totalorder %s147, %s150
      %p159 = scmp.eq.s32.totalorder %s24, 2
      %p160 = por %p158, %p159
      %p161 = scmp.ne.s32.totalorder %s150, %s151
      %p162 = scmp.eq.s32.totalorder %s24, 0
      %p163 = por %p161, %p162
      %p164 = scmp.ne.s32.totalorder %s150, %s151
      %p165 = scmp.eq.s32.totalorder %s25, 2
      %p166 = por %p164, %p165
      %p168 = scmp.ne.s32.totalorder %s151, %s167
      %p169 = scmp.eq.s32.totalorder %s25, 0
      %p170 = por %p168, %p169
      %s171 = ssub.s32 %s26, %s38
      %p172 = scmp.eq.s32.totalorder %s171, 0
      %s174 = sadd.s32 %s173, 1
      %s175 = scalar_select %p172, %s173, %s174
      %p178 = pneg %p172
      %p179 = scmp.eq.s32.totalorder %s19, 2
      %p180 = por %p178, %p179
      %p181 = scmp.ne.s32.totalorder %s173, %s176
      %p182 = scmp.eq.s32.totalorder %s19, 0
      %p183 = por %p181, %p182
      %p184 = scmp.ne.s32.totalorder %s173, %s176
      %p185 = scmp.eq.s32.totalorder %s24, 2
      %p186 = por %p184, %p185
      %p187 = scmp.ne.s32.totalorder %s176, %s177
      %p188 = scmp.eq.s32.totalorder %s24, 0
      %p189 = por %p187, %p188
      %p190 = scmp.ne.s32.totalorder %s176, %s177
      %p191 = scmp.eq.s32.totalorder %s25, 2
      %p192 = por %p190, %p191
      %p194 = scmp.ne.s32.totalorder %s177, %s193
      %p195 = scmp.eq.s32.totalorder %s25, 0
      %p196 = por %p194, %p195
      %s197 = ssub.s32 %s26, %s38
      %p198 = scmp.eq.s32.totalorder %s197, 0
      %s200 = sadd.s32 %s199, 1
      %s201 = scalar_select %p198, %s199, %s200
      %p204 = pneg %p198
      %p205 = scmp.eq.s32.totalorder %s19, 2
      %p206 = por %p204, %p205
      %p207 = scmp.ne.s32.totalorder %s199, %s202
      %p208 = scmp.eq.s32.totalorder %s19, 0
      %p209 = por %p207, %p208
      %p210 = scmp.ne.s32.totalorder %s199, %s202
      %p211 = scmp.eq.s32.totalorder %s24, 2
      %p212 = por %p210, %p211
      %p213 = scmp.ne.s32.totalorder %s202, %s203
      %p214 = scmp.eq.s32.totalorder %s24, 0
      %p215 = por %p213, %p214
      %p216 = scmp.ne.s32.totalorder %s202, %s203
      %p217 = scmp.eq.s32.totalorder %s25, 2
      %p218 = por %p216, %p217
      %p220 = scmp.ne.s32.totalorder %s203, %s219
      %p221 = scmp.eq.s32.totalorder %s25, 0
      %p222 = por %p220, %p221
      %s223 = ssub.s32 %s26, %s38
      %s224 = ssub.s32 %s27, %s34
      %s225 = sor.u32 %s223, %s224
      %p226 = scmp.eq.s32.totalorder %s225, 0
      %s228 = sadd.s32 %s227, 1
      %s229 = scalar_select %p226, %s227, %s228
      %p232 = pneg %p226
      %p233 = scmp.eq.s32.totalorder %s19, 2
      %p234 = por %p232, %p233
      %p235 = scmp.ne.s32.totalorder %s227, %s230
      %p236 = scmp.eq.s32.totalorder %s19, 0
      %p237 = por %p235, %p236
      %p238 = scmp.ne.s32.totalorder %s227, %s230
      %p239 = scmp.eq.s32.totalorder %s24, 2
      %p240 = por %p238, %p239
      %p241 = scmp.ne.s32.totalorder %s230, %s231
      %p242 = scmp.eq.s32.totalorder %s24, 0
      %p243 = por %p241, %p242
      %p244 = scmp.ne.s32.totalorder %s230, %s231
      %p245 = scmp.eq.s32.totalorder %s25, 2
      %p246 = por %p244, %p245
      %p248 = scmp.ne.s32.totalorder %s231, %s247
      %p249 = scmp.eq.s32.totalorder %s25, 0
      %p250 = por %p248, %p249
      %p251 = scmp.le.s32.totalorder 1, %s19
      %p252 = scmp.lt.s32.totalorder %s19, 4
      %p253 = pnand %p251, %p252
      %p254 = pneg %p253
      // Predicated region
      $region9: #{tpu_custom_call.1} parent=5 // pred_check
        _
      $region10: #{tpu_custom_call.1} parent=5 // pred_check_branch
        %256 = sbr.rel (%p253) target = $region12
      $region11: #{tpu_custom_call.1} parent=5 // pred_region
        %s257 = ssub.s32 %s19, 1
      $region12: #{tpu_custom_call.1} parent=5 // pred_fallthru
        _
      %p258 = scmp.lt.s32.totalorder %s19, 3
      // Predicated region
      $region13: #{tpu_custom_call.1} parent=5 // pred_check
        %p259 = pneg %p258
      $region14: #{tpu_custom_call.1} parent=5 // pred_check_branch
        %261 = sbr.rel (%p259) target = $region16
      $region15: #{tpu_custom_call.1} parent=5 // pred_region
        // Predicated region
        $region17: #{tpu_custom_call.1} parent=15 // pred_check
          %p262 = pneg %p53
        $region18: #{tpu_custom_call.1} parent=15 // pred_check_branch
          %264 = sbr.rel (%p262) target = $region20
        $region19: #{tpu_custom_call.1} parent=15 // pred_region
          %s265 = smul.u32 4, %s27
          %p266 = scmp.lt.s32.totalorder %s26, 2
          %s267 = scalar_select %p266, %s26, 2
          %p268 = scmp.lt.s32.totalorder %s265, 3
          %s269 = scalar_select %p268, %s265, 3
          %s270 = smul.addr %s267, 4
          %s271 = sadd.s32 %s269, %s270
          %s272 = smul.addr %s271, 8
          %s273 = scalar_lea.vmem %s0, %s272
          %s274 = smul.u32 4, %s27
        $region20: #{tpu_custom_call.1} parent=15 // pred_fallthru
          _
        // Predicated region
        $region21: #{tpu_custom_call.1} parent=15 // pred_check
          %p275 = pneg %p79
        $region22: #{tpu_custom_call.1} parent=15 // pred_check_branch
          %277 = sbr.rel (%p275) target = $region24
        $region23: #{tpu_custom_call.1} parent=15 // pred_region
          %p278 = scmp.lt.s32.totalorder %s26, 2
          %s279 = scalar_select %p278, %s26, 2
          %s280 = scalar_lea.vmem %s1, %s279
        $region24: #{tpu_custom_call.1} parent=15 // pred_fallthru
          _
        // Predicated region
        $region25: #{tpu_custom_call.1} parent=15 // pred_check
          %p281 = pneg %p105
        $region26: #{tpu_custom_call.1} parent=15 // pred_check_branch
          %283 = sbr.rel (%p281) target = $region28
        $region27: #{tpu_custom_call.1} parent=15 // pred_region
          %p284 = scmp.lt.s32.totalorder %s26, 2
          %s285 = scalar_select %p284, %s26, 2
          %s286 = scalar_lea.vmem %s2, %s285
        $region28: #{tpu_custom_call.1} parent=15 // pred_fallthru
          _
        // Predicated region
        $region29: #{tpu_custom_call.1} parent=15 // pred_check
          %p287 = pneg %p131
        $region30: #{tpu_custom_call.1} parent=15 // pred_check_branch
          %289 = sbr.rel (%p287) target = $region32
        $region31: #{tpu_custom_call.1} parent=15 // pred_region
          %p290 = scmp.lt.s32.totalorder %s26, 2
          %s291 = scalar_select %p290, %s26, 2
          %s292 = smul.addr %s291, 2
          %s293 = scalar_lea.vmem %s3, %s292
        $region32: #{tpu_custom_call.1} parent=15 // pred_fallthru
          _
        // Predicated region
        $region33: #{tpu_custom_call.1} parent=15 // pred_check
          %p294 = pneg %p157
        $region34: #{tpu_custom_call.1} parent=15 // pred_check_branch
          %296 = sbr.rel (%p294) target = $region36
        $region35: #{tpu_custom_call.1} parent=15 // pred_region
          %p297 = scmp.lt.s32.totalorder %s26, 2
          %s298 = scalar_select %p297, %s26, 2
          %s299 = scalar_lea.vmem %s4, %s298
        $region36: #{tpu_custom_call.1} parent=15 // pred_fallthru
          _
        // Predicated region
        $region37: #{tpu_custom_call.1} parent=15 // pred_check
          %p300 = pneg %p183
        $region38: #{tpu_custom_call.1} parent=15 // pred_check_branch
          %302 = sbr.rel (%p300) target = $region40
        $region39: #{tpu_custom_call.1} parent=15 // pred_region
          %s303 = sand.u32 %s173, 1
          %s304 = scalar_lea.sflag [#allocation3], %s303
          %s305 = sand.u32 %s173, 1
          %s306 = smul.addr %s305, 64
          %s307 = scalar_lea.vmem [#allocation2], %s306
          %s309 = ssub.s32 1024, 1024
          %310 = vsyncadd %s304, %s309
          %s311 = smul.addr %s26, 16
          %s312 = smul.addr %s311, 64
          %s313 = scalar_lea.hbm %s5, %s312
          %s314 = sshll.u32 %s307, 4
          %s315 = int_to_ptr.vmem [resolvable:$true] %s314
          %320 = dma.hbm_to_vmem [thread:$0]  %s313, 1024, %s315, %s304, 64, 64, 4
        $region40: #{tpu_custom_call.1} parent=15 // pred_fallthru
          _
        // Predicated region
        $region41: #{tpu_custom_call.1} parent=15 // pred_check
          %p321 = pneg %p209
        $region42: #{tpu_custom_call.1} parent=15 // pred_check_branch
          %323 = sbr.rel (%p321) target = $region44
        $region43: #{tpu_custom_call.1} parent=15 // pred_region
          %p324 = scmp.lt.s32.totalorder %s26, 2
          %s325 = scalar_select %p324, %s26, 2
          %s326 = scalar_lea.vmem %s6, %s325
        $region44: #{tpu_custom_call.1} parent=15 // pred_fallthru
          _
      $region16: #{tpu_custom_call.1} parent=5 // pred_fallthru
        _
      %p327 = scmp.le.s32.totalorder 1, %s19
      %p328 = scmp.lt.s32.totalorder %s19, 4
      %p329 = pnand %p327, %p328
      %p330 = pneg %p329
      // Predicated region
      $region45: #{tpu_custom_call.1} parent=5 // pred_check
        _
      $region46: #{tpu_custom_call.1} parent=5 // pred_check_branch
        %332 = sbr.rel (%p329) target = $region48
      $region47: #{tpu_custom_call.1} parent=5 // pred_region
        %s333 = ssub.s32 %s19, 1
        %s334 = sand.u32 %s176, 1
        %s335 = scalar_lea.sflag [#allocation3], %s334
        %s336 = sand.u32 %s176, 1
        %s337 = smul.addr %s336, 64
        %s338 = scalar_lea.vmem [#allocation2], %s337
        // Predicated region
        $region49: #{tpu_custom_call.1} parent=47 // pred_check
          %p339 = pneg %p189
        $region50: #{tpu_custom_call.1} parent=47 // pred_check_branch
          %341 = sbr.rel (%p339) target = $region52
        $region51: #{tpu_custom_call.1} parent=47 // pred_region
          %342 = dma.done %s335, 1024
        $region52: #{tpu_custom_call.1} parent=47 // pred_fallthru
          _
        %s343 = smul.u32 4, %s29
        %p344 = scmp.lt.s32.totalorder %s28, 2
        %s345 = scalar_select %p344, %s28, 2
        %p346 = scmp.lt.s32.totalorder %s343, 3
        %s347 = scalar_select %p346, %s343, 3
        %s348 = smul.addr %s345, 4
        %s349 = sadd.s32 %s347, %s348
        %s350 = smul.addr %s349, 8
        %s351 = scalar_lea.vmem %s0, %s350
        %p352 = pneg %p59
        %p353 = pneg %p56
        %p354 = scmp.lt.s32.totalorder %s28, 2
        %s355 = scalar_select %p354, %s28, 2
        %s356 = scalar_lea.vmem %s1, %s355
        %p357 = pneg %p85
        %p358 = pneg %p82
        %p359 = scmp.lt.s32.totalorder %s28, 2
        %s360 = scalar_select %p359, %s28, 2
        %s361 = scalar_lea.vmem %s2, %s360
        %p362 = pneg %p111
        %p363 = pneg %p108
        %p364 = scmp.lt.s32.totalorder %s28, 2
        %s365 = scalar_select %p364, %s28, 2
        %s366 = smul.addr %s365, 2
        %s367 = scalar_lea.vmem %s3, %s366
        %p368 = pneg %p137
        %p369 = pneg %p134
        %p370 = scmp.lt.s32.totalorder %s28, 2
        %s371 = scalar_select %p370, %s28, 2
        %s372 = scalar_lea.vmem %s4, %s371
        %p373 = pneg %p163
        %p374 = pneg %p160
        %s375 = sand.u32 %s176, 1
        %s376 = scalar_lea.sflag [#allocation3], %s375
        %s377 = sand.u32 %s176, 1
        %s378 = smul.addr %s377, 64
        %s379 = scalar_lea.vmem [#allocation2], %s378
        %p380 = pneg %p189
        %p381 = pneg %p186
        %p382 = scmp.lt.s32.totalorder %s28, 2
        %s383 = scalar_select %p382, %s28, 2
        %s384 = scalar_lea.vmem %s6, %s383
        %p385 = pneg %p215
        %p386 = pneg %p212
        %p387 = pneg %p243
        %p388 = pneg %p240
        %s389 = sand.u32 %s230, 1
        %s390 = scalar_lea.sflag [#allocation4], %s389
        %s391 = sand.u32 %s230, 1
        %s392 = smul.addr %s391, 16
        %s393 = scalar_lea.vmem [#allocation5], %s392
        %s394 = smul.u32 4, %s29
        %p395 = scmp.lt.s32.totalorder %s28, 2
        %s396 = scalar_select %p395, %s28, 2
        %p397 = scmp.lt.s32.totalorder %s394, 3
        %s398 = scalar_select %p397, %s394, 3
        %s399 = smul.addr %s396, 4
        %s400 = sadd.s32 %s398, %s399
        %s401 = smul.addr %s400, 8
        %s402 = scalar_lea.vmem %s0, %s401
        %s403 = smul.u32 4, %s29
        %p404 = scmp.lt.s32.totalorder %s28, 2
        %s405 = scalar_select %p404, %s28, 2
        %s406 = scalar_lea.vmem %s1, %s405
        %p407 = scmp.lt.s32.totalorder %s28, 2
        %s408 = scalar_select %p407, %s28, 2
        %s409 = scalar_lea.vmem %s2, %s408
        %p410 = scmp.lt.s32.totalorder %s28, 2
        %s411 = scalar_select %p410, %s28, 2
        %s412 = smul.addr %s411, 2
        %s413 = scalar_lea.vmem %s3, %s412
        %p414 = scmp.lt.s32.totalorder %s28, 2
        %s415 = scalar_select %p414, %s28, 2
        %s416 = scalar_lea.vmem %s4, %s415
        %p417 = scmp.lt.s32.totalorder %s28, 2
        %s418 = scalar_select %p417, %s28, 2
        %s419 = scalar_lea.vmem %s6, %s418
        %s420 = smul.u32 4, %s29
        %v422 = vld [vmem:[%s402] sm:$0xff]
        %v423 = vld [vmem:[%s402 + $0x8] sm:$0xff]
        %v424 = vld [vmem:[%s402 + $0x10] sm:$0xff]
        %v425 = vld [vmem:[%s402 + $0x18] sm:$0xff]
        %v426 = vld [vmem:[%s406] sm:$0x1]
        %v427 = vld [vmem:[%s409] sm:$0x1]
        %vm428 = vcmask 31744
        %v429 = vsel %vm428, %v422, 0.0
        %430 = vadd.xlane.f32.xlu0 %v429
        %v431 = vpop.xlane.xlu0 %430
        %v432 = vsel %vm428, %v423, 0.0
        %433 = vadd.xlane.f32.xlu0 %v432
        %v434 = vpop.xlane.xlu0 %433
        %v435 = vsel %vm428, %v424, 0.0
        %436 = vadd.xlane.f32.xlu0 %v435
        %v437 = vpop.xlane.xlu0 %436
        %v438 = vsel %vm428, %v425, 0.0
        %439 = vadd.xlane.f32.xlu0 %v438
        %v440 = vpop.xlane.xlu0 %439
        %v441 = vrcp.pop 4.0
        %v442 = vmul.f32 %v431, %v441
        %v443 = vmul.f32 %v434, %v441
        %v444 = vmul.f32 %v437, %v441
        %v445 = vmul.f32 %v440, %v441
        %v446 = vsub.f32 %v422, %v442
        %v447 = vsub.f32 %v423, %v443
        %v448 = vsub.f32 %v424, %v444
        %v449 = vsub.f32 %v425, %v445
        %v450 = vmul.f32 %v446, %v446
        %v451 = vmul.f32 %v447, %v447
        %v452 = vmul.f32 %v448, %v448
        %v453 = vmul.f32 %v449, %v449
        %v454 = vsel %vm428, %v450, 0.0
        %455 = vadd.xlane.f32.xlu0 %v454
        %v456 = vpop.xlane.xlu0 %455
        %v457 = vsel %vm428, %v451, 0.0
        %458 = vadd.xlane.f32.xlu0 %v457
        %v459 = vpop.xlane.xlu0 %458
        %v460 = vsel %vm428, %v452, 0.0
        %461 = vadd.xlane.f32.xlu0 %v460
        %v462 = vpop.xlane.xlu0 %461
        %v463 = vsel %vm428, %v453, 0.0
        %464 = vadd.xlane.f32.xlu0 %v463
        %v465 = vpop.xlane.xlu0 %464
        %v466 = vmul.f32 %v456, 0.33333334
        %v467 = vmul.f32 %v459, 0.33333334
        %v468 = vmul.f32 %v462, 0.33333334
        %v469 = vmul.f32 %v465, 0.33333334
        %v470 = vrsqrt.pop %v466
        %v471 = vmul.f32 %v466, %v470
        %vm472 = vcmp.eq.f32.partialorder %v466, inf
        %v473 = vsel %vm472, %v466, %v471
        %vm474 = vcmp.eq.f32.partialorder %v466, 0.0
        %v475 = vand.u32 %v466, 2147483648
        %v476 = vsel %vm474, %v475, %v473
        %v477 = vrsqrt.pop %v467
        %v478 = vmul.f32 %v467, %v477
        %vm479 = vcmp.eq.f32.partialorder %v467, inf
        %v480 = vsel %vm479, %v467, %v478
        %vm481 = vcmp.eq.f32.partialorder %v467, 0.0
        %v482 = vand.u32 %v467, 2147483648
        %v483 = vsel %vm481, %v482, %v480
        %v484 = vrsqrt.pop %v468
        %v485 = vmul.f32 %v468, %v484
        %vm486 = vcmp.eq.f32.partialorder %v468, inf
        %v487 = vsel %vm486, %v468, %v485
        %vm488 = vcmp.eq.f32.partialorder %v468, 0.0
        %v489 = vand.u32 %v468, 2147483648
        %v490 = vsel %vm488, %v489, %v487
        %v491 = vrsqrt.pop %v469
        %v492 = vmul.f32 %v469, %v491
        %vm493 = vcmp.eq.f32.partialorder %v469, inf
        %v494 = vsel %vm493, %v469, %v492
        %vm495 = vcmp.eq.f32.partialorder %v469, 0.0
        %v496 = vand.u32 %v469, 2147483648
        %v497 = vsel %vm495, %v496, %v494
        %v498 = vadd.f32 %v476, 1e-06
        %v499 = vadd.f32 %v483, 1e-06
        %v500 = vadd.f32 %v490, 1e-06
        %v501 = vadd.f32 %v497, 1e-06
        %v502 = vrcp.pop %v498
        %v503 = vrcp.pop %v499
        %v504 = vrcp.pop %v500
        %v505 = vrcp.pop %v501
        %v506 = vmul.f32 %v446, %v502
        %v507 = vmul.f32 %v447, %v503
        %v508 = vmul.f32 %v448, %v504
        %v509 = vmul.f32 %v449, %v505
        %v511 = vlaneseq
        %v512 = vshrl.u32 %v511, 7
        %v513 = vsub.s32 0, %v512
        %v514 = vrot.slane %v426, %v513
        %v516 = vmul.f32 %v514, %v506
        %v517 = vmul.f32 %v514, %v507
        %v518 = vmul.f32 %v514, %v508
        %v519 = vmul.f32 %v514, %v509
        %v521 = vlaneseq
        %v522 = vshrl.u32 %v521, 7
        %v523 = vsub.s32 0, %v522
        %v524 = vrot.slane %v427, %v523
        %v526 = vadd.f32 %v516, %v524
        %v527 = vadd.f32 %v517, %v524
        %v528 = vadd.f32 %v518, %v524
        %v529 = vadd.f32 %v519, %v524
        %v530 = vpack.c.bf16 %v527, %v526
        %v531 = vpack.c.bf16 %v529, %v528
        %v532 = vld [vmem:[%s413] sm:$0x3]
        %v533 = vld [vmem:[%s416] sm:$0x1]
        %v535 = vlaneseq
        %v536 = vshrl.u32 %v535, 7
        %v537 = vsub.s32 0, %v536
        %v538 = vrot.slane %v533, %v537
        %v541 = vsel %vm428, %v530, 0
        %v544 = vsel %vm428, %v531, 0
        %vm546 = vcmask 1041408
        %v548 = vsel %vm546, %v532, 0
        %550 = vmatprep.subr.bf16.mxu0 0
        %551 = vmatpush1.bf16.msra.mxu0 0
        %552 = vmatprep.subr.bf16.mxu0 0
        %553 = vmatpush1.bf16.msra.mxu0 0
        %554 = vmatprep.subr.bf16.mxu0 0
        %555 = vmatpush1.bf16.msra.mxu0 0
        %556 = vmatprep.subr.bf16.mxu0 0
        %557 = vmatpush1.bf16.msra.mxu0 0
        %558 = vmatprep.subr.bf16.mxu0 0
        %559 = vmatpush1.bf16.msra.mxu0 0
        %560 = vmatprep.subr.bf16.mxu0 0
        %561 = vmatpush1.bf16.msra.mxu0 0
        %562 = vmatprep.subr.bf16.mxu0 0
        %563 = vmatpush1.bf16.msra.mxu0 0
        %564 = vmatprep.subr.bf16.mxu0 0
        %565 = vmatpush1.bf16.msra.mxu0 %v548
        %566 = vmatprep.subr.bf16.mxu0 0
        %567 = vmatpush2.bf16.msra.mxu0 0
        %568 = vmatprep.subr.bf16.mxu0 0
        %569 = vmatpush2.bf16.msra.mxu0 0
        %570 = vmatprep.subr.bf16.mxu0 0
        %571 = vmatpush2.bf16.msra.mxu0 0
        %572 = vmatprep.subr.bf16.mxu0 0
        %573 = vmatpush2.bf16.msra.mxu0 0
        %574 = vmatprep.subr.bf16.mxu0 0
        %575 = vmatpush2.bf16.msra.mxu0 0
        %576 = vmatprep.subr.bf16.mxu0 0
        %577 = vmatpush2.bf16.msra.mxu0 0
        %578 = vmatprep.subr.bf16.mxu0 0
        %579 = vmatpush2.bf16.msra.mxu0 0
        %580 = vmatprep.subr.bf16.mxu0 0
        %581 = vmatpush2.bf16.msra.mxu0 0
        %582 = vmatprep.mubr.bf16.mxu0 0
        %583 = vmatmul.mubr.bf16.gmra.mxu0 %v541
        %v584 = vpop.f32.mrf.mxu0
        %v585 = vadd.f32 %v538, %v584
        %v586 = vpop.f32.mrf.mxu0
        %v587 = vpop.f32.mrf.mxu0
        %v588 = vadd.f32 %v538, %v587
        %v589 = vpop.f32.mrf.mxu0
        %590 = vmatprep.mubr.bf16.mxu0 0
        %591 = vmatmul.mubr.bf16.gmra.mxu0 %v544
        %v592 = vpop.f32.mrf.mxu0
        %v593 = vadd.f32 %v538, %v592
        %v594 = vpop.f32.mrf.mxu0
        %v595 = vpop.f32.mrf.mxu0
        %v596 = vadd.f32 %v538, %v595
        %v597 = vpop.f32.mrf.mxu0
        %598 = vdwg.mxu0
        %v599 = vmax.f32 %v585, 0.0
        %v600 = vmax.f32 %v588, 0.0
        %v601 = vmax.f32 %v593, 0.0
        %v602 = vmax.f32 %v596, 0.0
        %v603 = vpack.c.bf16 %v600, %v599
        %v604 = vpack.c.bf16 %v602, %v601
        %v605 = vld [vmem:[%s338] sm:$0xf]
        %v606 = vld [vmem:[%s338 + $0x4] sm:$0xf]
        %v607 = vld [vmem:[%s338 + $0x8] sm:$0xf]
        %v608 = vld [vmem:[%s338 + $0xc] sm:$0xf]
        %v609 = vld [vmem:[%s338 + $0x10] sm:$0xf]
        %v610 = vld [vmem:[%s338 + $0x14] sm:$0xf]
        %v611 = vld [vmem:[%s338 + $0x18] sm:$0xf]
        %v612 = vld [vmem:[%s338 + $0x1c] sm:$0xf]
        %v613 = vld [vmem:[%s338 + $0x20] sm:$0xf]
        %v614 = vld [vmem:[%s338 + $0x24] sm:$0xf]
        %v615 = vld [vmem:[%s338 + $0x28] sm:$0xf]
        %v616 = vld [vmem:[%s338 + $0x2c] sm:$0xf]
        %v617 = vld [vmem:[%s338 + $0x30] sm:$0xf]
        %v618 = vld [vmem:[%s338 + $0x34] sm:$0xf]
        %v619 = vld [vmem:[%s338 + $0x38] sm:$0xf]
        %v620 = vld [vmem:[%s338 + $0x3c] sm:$0xf]
        %v621 = vld [vmem:[%s419] sm:$0x1]
        %v623 = vlaneseq
        %v624 = vshrl.u32 %v623, 7
        %v625 = vsub.s32 0, %v624
        %v626 = vrot.slane %v621, %v625
        %v644 = vunpack.c.l.b16 %v605
        %v645 = vunpack.c.l.b16 %v606
        %v646 = vunpack.c.l.b16 %v607
        %v647 = vunpack.c.l.b16 %v608
        %v648 = vunpack.c.l.b16 %v609
        %v649 = vunpack.c.l.b16 %v610
        %v650 = vunpack.c.l.b16 %v611
        %v651 = vunpack.c.l.b16 %v612
        %v652 = vunpack.c.l.b16 %v613
        %v653 = vunpack.c.l.b16 %v614
        %v654 = vunpack.c.l.b16 %v615
        %v655 = vunpack.c.l.b16 %v616
        %v656 = vunpack.c.l.b16 %v617
        %v657 = vunpack.c.l.b16 %v618
        %v658 = vunpack.c.l.b16 %v619
        %v659 = vunpack.c.l.b16 %v620
        %v660 = vpack.c.b16 %v645, %v644
        %v661 = vpack.c.b16 %v647, %v646
        %v662 = vpack.c.b16 %v649, %v648
        %v663 = vpack.c.b16 %v651, %v650
        %v664 = vpack.c.b16 %v653, %v652
        %v665 = vpack.c.b16 %v655, %v654
        %v666 = vpack.c.b16 %v657, %v656
        %v667 = vpack.c.b16 %v659, %v658
        %676 = vmatprep.subr.bf16.mxu0 0
        %677 = vmatpush1.bf16.msra.mxu0 %v667
        %678 = vmatprep.subr.bf16.mxu0 0
        %679 = vmatpush1.bf16.msra.mxu0 %v666
        %680 = vmatprep.subr.bf16.mxu0 0
        %681 = vmatpush1.bf16.msra.mxu0 %v665
        %682 = vmatprep.subr.bf16.mxu0 0
        %683 = vmatpush1.bf16.msra.mxu0 %v664
        %684 = vmatprep.subr.bf16.mxu0 0
        %685 = vmatpush1.bf16.msra.mxu0 %v663
        %686 = vmatprep.subr.bf16.mxu0 0
        %687 = vmatpush1.bf16.msra.mxu0 %v662
        %688 = vmatprep.subr.bf16.mxu0 0
        %689 = vmatpush1.bf16.msra.mxu0 %v661
        %690 = vmatprep.subr.bf16.mxu0 0
        %691 = vmatpush1.bf16.msra.mxu0 %v660
        %692 = vmatprep.subr.bf16.mxu0 0
        %693 = vmatpush2.bf16.msra.mxu0 0
        %694 = vmatprep.subr.bf16.mxu0 0
        %695 = vmatpush2.bf16.msra.mxu0 0
        %696 = vmatprep.subr.bf16.mxu0 0
        %697 = vmatpush2.bf16.msra.mxu0 0
        %698 = vmatprep.subr.bf16.mxu0 0
        %699 = vmatpush2.bf16.msra.mxu0 0
        %700 = vmatprep.subr.bf16.mxu0 0
        %701 = vmatpush2.bf16.msra.mxu0 0
        %702 = vmatprep.subr.bf16.mxu0 0
        %703 = vmatpush2.bf16.msra.mxu0 0
        %704 = vmatprep.subr.bf16.mxu0 0
        %705 = vmatpush2.bf16.msra.mxu0 0
        %706 = vmatprep.subr.bf16.mxu0 0
        %707 = vmatpush2.bf16.msra.mxu0 0
        %708 = vmatprep.mubr.bf16.mxu0 0
        %709 = vmatmul.mubr.bf16.gmra.mxu0 %v603
        %v710 = vpop.f32.mrf.mxu0
        %v711 = vadd.f32 %v626, %v710
        %v712 = vpop.f32.mrf.mxu0
        %v713 = vpop.f32.mrf.mxu0
        %v714 = vadd.f32 %v626, %v713
        %v715 = vpop.f32.mrf.mxu0
        %716 = vmatprep.mubr.bf16.mxu0 0
        %717 = vmatmul.mubr.bf16.gmra.mxu0 %v604
        %v718 = vpop.f32.mrf.mxu0
        %v719 = vadd.f32 %v626, %v718
        %v720 = vpop.f32.mrf.mxu0
        %v721 = vpop.f32.mrf.mxu0
        %v722 = vadd.f32 %v626, %v721
        %v723 = vpop.f32.mrf.mxu0
        %724 = vdwg.mxu0
        %v725 = vpack.c.bf16 %v714, %v711
        %v726 = vpack.c.bf16 %v722, %v719
        %v729 = vunpack.c.l.b16 %v725
        %v730 = vunpack.c.h.b16 %v725
        %v731 = vunpack.c.l.b16 %v726
        %v732 = vunpack.c.h.b16 %v726
        %v733 = vpack.c.b16 %v729, %v729
        %v734 = vpack.c.b16 %v730, %v730
        %v735 = vpack.c.b16 %v731, %v731
        %v736 = vpack.c.b16 %v732, %v732
        %741 = vst [vmem:[%s393] sm:$0xf] %v733
        %742 = vst [vmem:[%s393 + $0x4] sm:$0xf] %v734
        %743 = vst [vmem:[%s393 + $0x8] sm:$0xf] %v735
        %744 = vst [vmem:[%s393 + $0xc] sm:$0xf] %v736
        %s745 = sand.u32 %s230, 1
        %s746 = scalar_lea.sflag [#allocation4], %s745
        %s747 = sand.u32 %s230, 1
        %s748 = smul.addr %s747, 16
        %s749 = scalar_lea.vmem [#allocation5], %s748
        // Predicated region
        $region53: #{tpu_custom_call.1} parent=47 // pred_check
          %p750 = pneg %p240
        $region54: #{tpu_custom_call.1} parent=47 // pred_check_branch
          %752 = sbr.rel (%p750) target = $region56
        $region55: #{tpu_custom_call.1} parent=47 // pred_region
          %s753 = smul.u32 4, %s29
          %s755 = ssub.s32 256, 256
          %756 = vsyncadd %s746, %s755
          %s757 = smul.addr %s28, 4
          %s758 = sadd.s32 %s753, %s757
          %s759 = smul.addr %s758, 64
          %s760 = scalar_lea.hbm %s7, %s759
          %s761 = sshll.u32 %s749, 4
          %s762 = int_to_ptr.vmem [resolvable:$true] %s761
          %767 = dma.vmem_to_hbm [thread:$0]  %s762, 256, %s760, %s746, 64, 64, 4
        $region56: #{tpu_custom_call.1} parent=47 // pred_fallthru
          _
      $region48: #{tpu_custom_call.1} parent=5 // pred_fallthru
        _
      %p768 = scmp.le.s32.totalorder 2, %s19
      // Predicated region
      $region57: #{tpu_custom_call.1} parent=5 // pred_check
        %p769 = pneg %p768
      $region58: #{tpu_custom_call.1} parent=5 // pred_check_branch
        %771 = sbr.rel (%p769) target = $region60
      $region59: #{tpu_custom_call.1} parent=5 // pred_region
        %s772 = ssub.s32 %s19, 2
        // Predicated region
        $region61: #{tpu_custom_call.1} parent=59 // pred_check
          %p773 = pneg %p246
        $region62: #{tpu_custom_call.1} parent=59 // pred_check_branch
          %775 = sbr.rel (%p773) target = $region64
        $region63: #{tpu_custom_call.1} parent=59 // pred_region
          %s776 = sand.u32 %s231, 1
          %s777 = scalar_lea.sflag [#allocation4], %s776
          %s778 = sand.u32 %s231, 1
          %s779 = smul.addr %s778, 16
          %s780 = scalar_lea.vmem [#allocation5], %s779
          %781 = dma.done %s777, 256
        $region64: #{tpu_custom_call.1} parent=59 // pred_fallthru
          _
      $region60: #{tpu_custom_call.1} parent=5 // pred_fallthru
        _
    $region6: #{tpu_custom_call.1} parent=1 // loop_footer
      %s23 = sadd.s32 1, %s19
    $region7: #{tpu_custom_call.1} parent=1 // loop_footer_branch
      %18 = sbr.rel target = $region3
    $region8: #{tpu_custom_call.1} parent=1 // loop_exit
      _
    %782 = vsyncpa [#allocation3], 1
    %s783 = scalar_lea.sflag [#allocation3], 1
    %784 = vsyncpa %s783, 1
    %785 = vsyncpa [#allocation4], 1
    %s786 = scalar_lea.sflag [#allocation4], 1
    %787 = vsyncpa %s786, 1

</llo_original>
